<compile_context>
chip_gen: v7x
topology: tpu7x:2x2x1
jax: 0.10.0
libtpu: 0.0.40
codegen_flags: <defaults>
</compile_context>

<pallas_src>
import jax
import jax.numpy as jnp
from jax.experimental import pallas as pl
from jax.experimental.pallas import tpu as pltpu

N_HIDDEN = 512      # n in the original script
P_DROP = 0.1        # p in the original script (identity at inference)
USE_BF16 = True     # bf16 MXU operands, f32 accumulation / epilogues
LANES = 128

# ----- flat-wide layout constants (per image) --------------------------------------
NIN   = 800   # padded flat input rows (28*28 = 784)
NA1   = 736   # conv1 rows computed    (valid r = 28*i + j,    i,j < 26)
NP1   = 704   # pool1 rows computed    (anchors q = 56*i1+2*j1, i1,j1 < 13)
NA2   = 584   # conv2 rows computed    (valid s = 56*i2+2*j2,  i2,j2 < 11)
ND1   = 264   # deconv1 input grid: 16x16 dilated/padded (256 rows) + tap slack
NDC1  = 208   # deconv1 rows computed  (valid r = 16*y + x,    y,x < 13)
ND2C  = 456   # deconv2 column-compact grid: 30 rows x 15 cols (450) + tap slack
NOUT2 = 424   # deconv2 rows computed  (valid rho = 15*y + m,  y < 28, m < 14)

CONV1_OFFS    = tuple(28 * ki + kj for ki in range(3) for kj in range(3))
CONV2_OFFS    = tuple(56 * ki + 2 * kj for ki in range(3) for kj in range(3))
POOL2_ANCHORS = tuple(112 * i3 + 4 * j3 for i3 in range(5) for j3 in range(5))
D1_ROWS       = tuple((3 + 2 * (P // 5)) * 16 + 3 + 2 * (P % 5) for P in range(25))
DECONV1_OFFS  = tuple(16 * a + b for a in range(4) for b in range(4))
DECONV2_OFFS  = (0, 1, 15, 16, 30, 31)        # a*15 + {0,1} for a = 0..2
FC1_OFFS      = tuple(range(25))


# -----------------------------------------------------------------------------------
# roll-direction probe (run once, outside the main kernel)
# -----------------------------------------------------------------------------------
_ROLL_FORWARD = None


def _roll_is_forward():
    """True if pltpu.roll follows jnp.roll semantics (lane c -> lane c+shift)."""
    global _ROLL_FORWARD
    if _ROLL_FORWARD is None:
        def k(x_ref, o_ref):
            o_ref[...] = pltpu.roll(x_ref[...], 1, axis=1)
        x = jnp.tile(jnp.arange(LANES, dtype=jnp.float32)[None, :], (8, 1))
        y = pl.pallas_call(k, out_shape=jax.ShapeDtypeStruct((8, LANES), jnp.float32))(x)
        _ROLL_FORWARD = bool(y[0, 1] == 0.0)
    return _ROLL_FORWARD


# -----------------------------------------------------------------------------------
# in-kernel lane-packing helper (one shared convention with the weight packer)
# -----------------------------------------------------------------------------------
def _pack_groups(src_ref, offsets, nrows, csize, dst_ref):
    """Pack shifted row-slices of `src_ref` into 128-lane groups of `dst_ref`.

    Tap k = offsets[k] contributes src_ref[offsets[k]:offsets[k]+nrows, 0:csize) at
    dst lanes 128*(k // per) + roll(csize*(k % per)) + [0, csize), per = 128 // csize.
    Requires src lanes >= csize to be zero (guaranteed by zero-padded weights/biases).
    """
    per = LANES // csize
    ngroups = (len(offsets) + per - 1) // per
    for g in range(ngroups):
        taps = offsets[g * per:(g + 1) * per]
        t0 = taps[0]
        acc = src_ref[t0:t0 + nrows, :]
        for m in range(1, len(taps)):
            t = taps[m]
            acc = acc + pltpu.roll(src_ref[t:t + nrows, :], csize * m, axis=1)
        dst_ref[:, g * LANES:(g + 1) * LANES] = acc.astype(dst_ref.dtype)


# -----------------------------------------------------------------------------------
# The single fused kernel (one grid step == one image)
# -----------------------------------------------------------------------------------
def _fused_autoencoder_kernel(
    x_ref,                        # (NIN, 1)   f32, flat rows i*28 + j (zero tail pad)
    w1_ref, b1_ref,               # (9, 128)   f32 ; (1, 128) f32
    w2_ref, b2_ref,               # (256, 128) cdt ; (1, 128) f32
    wfc1_ref, bfc1_ref,           # (896, npad) cdt ; (1, npad) f32
    wfc2_ref, bfc2_ref,           # (npad, 3200) cdt ; (1, 3200) f32
    wd1_ref, bd1_ref,             # (512, 128) cdt ; (1, 128) f32
    wd2_ref, bd2_ref,             # (128, 128) cdt ; (1, 128) f32
    out_ref,                      # (NOUT2, 128) f32 (lane 0 even cols, lane 1 odd)
    xw_ref, a1_ref, p1_ref, lp2_ref, a2_ref, p2g_ref, lpfc_ref,
    d1_ref, lpd1_ref, dc1_ref, dgc_ref, lpd2_ref,
):
    f32 = jnp.float32
    cdt = w2_ref.dtype            # MXU operand dtype (bf16 or f32)

    # -- 0. broadcast the single input channel across all 128 lanes once ------------
    xw_ref[...] = jnp.broadcast_to(x_ref[...], (NIN, LANES))

    # -- 1. Conv2d(1,16,3) + ReLU: 9 lane-dense VPU FMAs, value-accumulated ----------
    acc1 = xw_ref[0:NA1, :] * w1_ref[0:1, :]
    for k in range(1, 9):
        t = CONV1_OFFS[k]
        acc1 = acc1 + xw_ref[t:t + NA1, :] * w1_ref[k:k + 1, :]
    a1_ref[...] = jnp.maximum(acc1 + b1_ref[...], 0.0)

    # -- 2. MaxPool2d(2,2): pooled anchors live at rows 56*i1 + 2*j1 -----------------
    p1_ref[...] = jnp.maximum(
        jnp.maximum(a1_ref[0:NP1, :], a1_ref[1:NP1 + 1, :]),
        jnp.maximum(a1_ref[28:NP1 + 28, :], a1_ref[29:NP1 + 29, :]),
    )

    # -- 3. Conv2d(16,32,3) + ReLU: 9 taps x 16 ci lane-packed -> one K=256 MXU dot --
    _pack_groups(p1_ref, CONV2_OFFS, NA2, 16, lp2_ref)
    a2_ref[...] = jnp.maximum(
        jnp.dot(lp2_ref[...], w2_ref[...], preferred_element_type=f32) + b2_ref[...],
        0.0)

    # -- 4. MaxPool2d(2,2) gathered straight into a compact (25,128) buffer ----------
    for P in range(25):
        u = POOL2_ANCHORS[P]
        p2g_ref[P:P + 1, :] = jnp.maximum(
            jnp.maximum(a2_ref[u:u + 1, :], a2_ref[u + 2:u + 3, :]),
            jnp.maximum(a2_ref[u + 56:u + 57, :], a2_ref[u + 58:u + 59, :]))

    # -- 5. Flatten + Linear(800,n) + ReLU: 25 anchors x 32 ch -> K=896, one dot -----
    _pack_groups(p2g_ref, FC1_OFFS, 1, 32, lpfc_ref)
    z = jnp.maximum(
        jnp.dot(lpfc_ref[...].astype(cdt), wfc1_ref[...], preferred_element_type=f32)
        + bfc1_ref[...], 0.0)

    # -- 6. Linear(n,800) + ReLU fused over all 25 positions: one (1,n)@(n,3200) dot -
    dec = jnp.maximum(
        jnp.dot(z.astype(cdt), wfc2_ref[...], preferred_element_type=f32)
        + bfc2_ref[...], 0.0)

    # -- 7. Unflatten + dilate/pad into the 16x16 deconv1 grid (25 row writes) -------
    d1_ref[...] = jnp.zeros_like(d1_ref)
    for P in range(25):
        r = D1_ROWS[P]
        d1_ref[r:r + 1, :] = dec[:, P * LANES:(P + 1) * LANES]

    # -- 8. ConvTranspose2d(32,16,4,s=2,op=1) + ReLU: 16 taps x 32 ci -> K=512, 1 dot
    _pack_groups(d1_ref, DECONV1_OFFS, NDC1, 32, lpd1_ref)
    dc1_ref[...] = jnp.maximum(
        jnp.dot(lpd1_ref[...], wd1_ref[...], preferred_element_type=f32)
        + bd1_ref[...], 0.0)

    # -- 9. row-dilate into the column-compact (30x15) deconv2 grid:
    #       13 CONTIGUOUS block copies (no strided / per-row scatter) ---------------
    dgc_ref[...] = jnp.zeros_like(dgc_ref)
    for p in range(13):
        dst = (2 + 2 * p) * 15 + 1
        dgc_ref[dst:dst + 13, :] = dc1_ref[p * 16:p * 16 + 13, :]

    # -- 10. ConvTranspose2d(16,1,3,s=2,op=1) + ReLU: 6 taps x 16 ci -> K=128, 1 dot,
    #        lane 0 = even output columns, lane 1 = odd output columns --------------
    _pack_groups(dgc_ref, DECONV2_OFFS, NOUT2, 16, lpd2_ref)
    out_ref[...] = jnp.maximum(
        jnp.dot(lpd2_ref[...], wd2_ref[...], preferred_element_type=f32)
        + bd2_ref[...], 0.0)


# -----------------------------------------------------------------------------------
# One-time parameter preparation (outside the per-call forward)
# -----------------------------------------------------------------------------------
def init_params(key, n=N_HIDDEN):
    """PyTorch-shaped synthetic parameters."""
    ks = jax.random.split(key, 12)
    s = 0.05
    p = {}
    p["w1"] = jax.random.normal(ks[0], (16, 1, 3, 3), jnp.float32) * s
    p["b1"] = jax.random.normal(ks[1], (16,), jnp.float32) * s
    p["w2"] = jax.random.normal(ks[2], (32, 16, 3, 3), jnp.float32) * s
    p["b2"] = jax.random.normal(ks[3], (32,), jnp.float32) * s
    p["wfc1"] = jax.random.normal(ks[4], (n, 32 * 5 * 5), jnp.float32) * s
    p["bfc1"] = jax.random.normal(ks[5], (n,), jnp.float32) * s
    p["wfc2"] = jax.random.normal(ks[6], (32 * 5 * 5, n), jnp.float32) * s
    p["bfc2"] = jax.random.normal(ks[7], (32 * 5 * 5,), jnp.float32) * s
    p["wd1"] = jax.random.normal(ks[8], (32, 16, 4, 4), jnp.float32) * s
    p["bd1"] = jax.random.normal(ks[9], (16,), jnp.float32) * s
    p["wd2"] = jax.random.normal(ks[10], (16, 1, 3, 3), jnp.float32) * s
    p["bd2"] = jax.random.normal(ks[11], (1,), jnp.float32) * s
    return p


def _pack_tap_weight(w_tcn, csize, k_rows, forward):
    """Pack per-tap weights (T, csize, N) to rows matching _pack_groups lane layout."""
    T = w_tcn.shape[0]
    N = w_tcn.shape[2]
    per = LANES // csize
    out = jnp.zeros((k_rows, N), jnp.float32)
    for k in range(T):
        g, m = divmod(k, per)
        lane = (csize * m) % LANES if forward else (-csize * m) % LANES
        row0 = LANES * g + lane
        out = out.at[row0:row0 + csize, :].set(w_tcn[k])
    return out


def prepare_params(p, n=N_HIDDEN):
    """Pre-transpose / flip / lane-pack / bf16-cast every weight once."""
    f32 = jnp.float32
    cdt = jnp.bfloat16 if USE_BF16 else jnp.float32
    npad = ((n + LANES - 1) // LANES) * LANES
    fwd = _roll_is_forward()

    def padN(a, rows, cols):
        return jnp.zeros((rows, cols), f32).at[:a.shape[0], :a.shape[1]].set(a)

    q = {}
    # Conv2d(1,16,3) (VPU): per tap a (1,128) row of output-channel weights
    w1 = jnp.transpose(p["w1"][:, 0], (1, 2, 0)).reshape(9, 16)            # [k, co]
    q["w1"] = padN(w1, 9, LANES)
    q["b1"] = padN(p["b1"][None, :], 1, LANES)

    # Conv2d(16,32,3): 9 taps x 16 ci packed along K=256, co padded to 128
    w2 = jnp.transpose(p["w2"], (2, 3, 1, 0)).reshape(9, 16, 32)           # [k, ci, co]
    w2 = jnp.zeros((9, 16, LANES), f32).at[:, :, :32].set(w2)
    q["w2"] = _pack_tap_weight(w2, 16, 256, fwd).astype(cdt)
    q["b2"] = padN(p["b2"][None, :], 1, LANES)

    # Linear(800, n): 25 anchors x 32 ch packed along K=896
    wfc1 = jnp.transpose(p["wfc1"].reshape(n, 32, 25), (2, 1, 0))          # [P, c, n]
    wfc1 = jnp.zeros((25, 32, npad), f32).at[:, :, :n].set(wfc1)
    q["wfc1"] = _pack_tap_weight(wfc1, 32, 896, fwd).astype(cdt)
    q["bfc1"] = padN(p["bfc1"][None, :], 1, npad)

    # Linear(n, 800) fused over all 25 positions: column 128*P + c = Wfc2[c*25+P, :]
    wfc2 = jnp.transpose(p["wfc2"].reshape(32, 25, n), (2, 1, 0))          # [n, P, c]
    wfc2 = jnp.zeros((npad, 25, LANES), f32).at[:n, :, :32].set(wfc2)
    q["wfc2"] = wfc2.reshape(npad, 25 * LANES).astype(cdt)
    bfc2 = jnp.transpose(p["bfc2"].reshape(32, 25))                        # [P, c]
    bfc2 = jnp.zeros((25, LANES), f32).at[:, :32].set(bfc2)
    q["bfc2"] = bfc2.reshape(1, 25 * LANES)

    # ConvTranspose2d(32,16,4): flipped direct-conv taps, 16 taps x 32 ci -> K=512
    wd1 = jnp.transpose(p["wd1"][:, :, ::-1, ::-1], (2, 3, 0, 1)).reshape(16, 32, 16)
    wd1 = jnp.zeros((16, 32, LANES), f32).at[:, :, :16].set(wd1)
    q["wd1"] = _pack_tap_weight(wd1, 32, 512, fwd).astype(cdt)
    q["bd1"] = padN(p["bd1"][None, :], 1, LANES)

    # ConvTranspose2d(16,1,3) on the column-compact grid: 6 taps x 16 ci -> K=128,
    # output col 0 = even output columns, col 1 = odd output columns.
    wf2 = p["wd2"][:, 0, ::-1, ::-1]                                       # [ci, a, b]
    wd2 = jnp.zeros((6, 16, LANES), f32)
    for a in range(3):
        wd2 = wd2.at[2 * a + 0, :, 0].set(wf2[:, a, 0])
        wd2 = wd2.at[2 * a + 1, :, 0].set(wf2[:, a, 2])
        wd2 = wd2.at[2 * a + 1, :, 1].set(wf2[:, a, 1])
    q["wd2"] = _pack_tap_weight(wd2, 16, 128, fwd).astype(cdt)
    q["bd2"] = jnp.zeros((1, LANES), f32).at[0, 0:2].set(p["bd2"][0])
    return q


# -----------------------------------------------------------------------------------
# Forward pass wrapper (single pallas_call)
# -----------------------------------------------------------------------------------
def autoencoder_forward(prepped, x_nchw):
    """Inference forward of `autoencoder` (Dropout = identity).
    x_nchw: (B, 1, 28, 28) f32 -> (B, 1, 28, 28) f32."""
    B = x_nchw.shape[0]
    npad = prepped["bfc1"].shape[1]
    cdt = prepped["w2"].dtype

    x = x_nchw.astype(jnp.float32).reshape(B, 28 * 28, 1)
    x = jnp.pad(x, ((0, 0), (0, NIN - 28 * 28), (0, 0)))

    grid_spec = pltpu.PrefetchScalarGridSpec(
        num_scalar_prefetch=0,
        grid=(B,),
        in_specs=[
            pl.BlockSpec((None, NIN, 1), lambda b: (b, 0, 0)),
            pl.BlockSpec((9, LANES), lambda b: (0, 0)),
            pl.BlockSpec((1, LANES), lambda b: (0, 0)),
            pl.BlockSpec((256, LANES), lambda b: (0, 0)),
            pl.BlockSpec((1, LANES), lambda b: (0, 0)),
            pl.BlockSpec((896, npad), lambda b: (0, 0)),
            pl.BlockSpec((1, npad), lambda b: (0, 0)),
            pl.BlockSpec((npad, 25 * LANES), lambda b: (0, 0)),
            pl.BlockSpec((1, 25 * LANES), lambda b: (0, 0)),
            pl.BlockSpec((512, LANES), lambda b: (0, 0)),
            pl.BlockSpec((1, LANES), lambda b: (0, 0)),
            pl.BlockSpec((LANES, LANES), lambda b: (0, 0)),
            pl.BlockSpec((1, LANES), lambda b: (0, 0)),
        ],
        out_specs=pl.BlockSpec((None, NOUT2, LANES), lambda b: (b, 0, 0)),
        scratch_shapes=[
            pltpu.VMEM((NIN, LANES), jnp.float32),    # xw   : lane-broadcast input
            pltpu.VMEM((NA1, LANES), jnp.float32),    # a1
            pltpu.VMEM((NP1, LANES), jnp.float32),    # p1
            pltpu.VMEM((NA2, 256), cdt),              # lp2  : packed conv2 LHS
            pltpu.VMEM((NA2, LANES), jnp.float32),    # a2
            pltpu.VMEM((32, LANES), jnp.float32),     # p2g  : 25 pooled anchors
            pltpu.VMEM((1, 896), jnp.float32),        # lpfc : packed FC1 LHS
            pltpu.VMEM((ND1, LANES), jnp.float32),    # d1   : deconv1 dilated grid
            pltpu.VMEM((NDC1, 512), cdt),             # lpd1 : packed deconv1 LHS
            pltpu.VMEM((NDC1, LANES), jnp.float32),   # dc1
            pltpu.VMEM((ND2C, LANES), jnp.float32),   # dgc  : column-compact grid
            pltpu.VMEM((NOUT2, LANES), cdt),          # lpd2 : packed deconv2 LHS
        ],
    )

    out = pl.pallas_call(
        _fused_autoencoder_kernel,
        out_shape=jax.ShapeDtypeStruct((B, NOUT2, LANES), jnp.float32),
        grid_spec=grid_spec,
        compiler_params=pltpu.CompilerParams(
            dimension_semantics=("parallel",),
            vmem_limit_bytes=32 * 1024 * 1024,
        ),
    )(x, prepped["w1"], prepped["b1"], prepped["w2"], prepped["b2"],
      prepped["wfc1"], prepped["bfc1"], prepped["wfc2"], prepped["bfc2"],
      prepped["wd1"], prepped["bd1"], prepped["wd2"], prepped["bd2"])

    # rows rho = 15*y + m; lane 0 = output col 2m, lane 1 = output col 2m+1
    eo = out[:, :28 * 15, 0:2].reshape(B, 28, 15, 2)[:, :, 0:14, :]
    y = eo.reshape(B, 28, 28)
    return y[:, None, :, :]


# -----------------------------------------------------------------------------------
# Pure-JAX/XLA reference with PyTorch semantics (for validation only)
# -----------------------------------------------------------------------------------
def autoencoder_reference(params, x_nchw):
    dn = ("NCHW", "OIHW", "NCHW")
    x = x_nchw.astype(jnp.float32)
    B = x.shape[0]

    h = jax.lax.conv_general_dilated(x, params["w1"], (1, 1), "VALID",
                                     dimension_numbers=dn)
    h = jax.nn.relu(h + params["b1"][None, :, None, None])
    h = jax.lax.reduce_window(h, -jnp.inf, jax.lax.max,
                              (1, 1, 2, 2), (1, 1, 2, 2), "VALID")
    h = jax.lax.conv_general_dilated(h, params["w2"], (1, 1), "VALID",
                                     dimension_numbers=dn)
    h = jax.nn.relu(h + params["b2"][None, :, None, None])
    h = jax.lax.reduce_window(h, -jnp.inf, jax.lax.max,
                              (1, 1, 2, 2), (1, 1, 2, 2), "VALID")
    z = jax.nn.relu(h.reshape(B, 32 * 5 * 5) @ params["wfc1"].T + params["bfc1"])
    d = jax.nn.relu(z @ params["wfc2"].T + params["bfc2"]).reshape(B, 32, 5, 5)

    w = jnp.transpose(params["wd1"][:, :, ::-1, ::-1], (1, 0, 2, 3))
    h = jax.lax.conv_general_dilated(d, w, (1, 1), ((3, 4), (3, 4)),
                                     lhs_dilation=(2, 2), dimension_numbers=dn)
    h = jax.nn.relu(h + params["bd1"][None, :, None, None])
    w = jnp.transpose(params["wd2"][:, :, ::-1, ::-1], (1, 0, 2, 3))
    h = jax.lax.conv_general_dilated(h, w, (1, 1), ((2, 3), (2, 3)),
                                     lhs_dilation=(2, 2), dimension_numbers=dn)
    h = jax.nn.relu(h + params["bd2"][None, :, None, None])
    return h


# -----------------------------------------------------------------------------------
if __name__ == "__main__":
    key = jax.random.PRNGKey(0)
    key_x, key_p = jax.random.split(key)

    # spatial size is fixed at 28x28 by the module (Linear(32*5*5, n)); small batch
    x = jax.random.normal(key_x, (2, 1, 28, 28), jnp.float32)
    params = init_params(key_p, n=N_HIDDEN)
    prepped = prepare_params(params, n=N_HIDDEN)     # one-time weight layout prep

    fwd = jax.jit(autoencoder_forward)
    out = jax.block_until_ready(fwd(prepped, x))

    assert out.shape == (2, 1, 28, 28), out.shape
    assert out.dtype == jnp.float32
    assert bool(jnp.all(jnp.isfinite(out)))
    assert bool(jnp.all(out >= 0.0))                 # module ends with ReLU

    # numerical check against a plain-XLA reference (bf16 MXU => loose-ish tolerance)
    ref = jax.block_until_ready(jax.jit(autoencoder_reference)(params, x))
    err = float(jnp.max(jnp.abs(out - ref)))
    scale = float(jnp.max(jnp.abs(ref)))
    assert err <= 1e-2 + 5e-2 * scale, (err, scale)

    print("KERNEL_OK")
</pallas_src>

<mosaic_0001>
module attributes {stable_mosaic.version = 11 : i64} {
  func.func @k(%arg0: memref<8x128xf32, #tpu.memory_space<vmem>>, %arg1: memref<8x128xf32, #tpu.memory_space<vmem>>) attributes {dimension_semantics = [], scalar_prefetch = 0 : i64, scratch_operands = 0 : i64, tpu.core_type = #tpu.core_type<tc>} {
    %c0 = arith.constant 0 : index
    %c0_0 = arith.constant 0 : index
    %0 = vector.load %arg0[%c0, %c0_0] : memref<8x128xf32, #tpu.memory_space<vmem>>, vector<8x128xf32>
    %c1_i32 = arith.constant 1 : i32
    %1 = tpu.dynamic_rotate %0 by %c1_i32 dim 1 : vector<8x128xf32>, i32 -> vector<8x128xf32>
    %c0_1 = arith.constant 0 : index
    %c0_2 = arith.constant 0 : index
    %2 = vector.load %arg1[%c0_1, %c0_2] : memref<8x128xf32, #tpu.memory_space<vmem>>, vector<8x128xf32>
    tpu.vector_store %arg1[%c0_1, %c0_2], %1 {strides = array<i32>} : memref<8x128xf32, #tpu.memory_space<vmem>>, vector<8x128xf32>,
    return
  }
}

</mosaic_0001>

<llo_original>
// kernel: tpu_custom_call.1
$region0: #{tpu_custom_call.1}
  #allocation0 [shape = 'u32[]', space=smem, size = 0x4, offset = 0x4, fixed_abs, tag = 'smem constant byte address 0x4 - core index']
  #allocation1 [shape = 'u32[144,128]{1,0:T(1,128)}', space=vmem, size = 0x12000, scoped, tag = 'internal scratch']
  %s0 = inlined_call_operand.hbm [shape: f32[8,128], index: 0, kind: input, shape index: {}]
  %s1 = inlined_call_operand.hbm [shape: f32[8,128], index: 1, kind: output, shape index: {}]
  %s2 = sld [smem:[#allocation0]]
  $region18: #{tpu_custom_call.1} parent=0
    _
  %s4 = ssub.s32 1, %s2
  %s5 = scalar_select 0, %s4, %s2
  $region1: #{tpu_custom_call.1} parent=0
    #allocation2 [shape = 'u8[4096]{0}', space=vmem, size = 0x1000, scoped, tag = 'input window, operand 0, single buffered']
    #allocation3 [shape = 's32[1]{0}', space=sflag, size = 0x4, scoped, tag = 'scoped memory for tpu_custom_call.1']
    #allocation4 [shape = 's32[1]{0}', space=sflag, size = 0x4, scoped, tag = 'scoped memory for tpu_custom_call.1']
    #allocation5 [shape = 'u8[4096]{0}', space=vmem, size = 0x1000, scoped, tag = 'output window, operand 0, single buffered']
    %6 = vsyncpa [#allocation3], 0
    %7 = vsyncpa [#allocation4], 0
    // Predicated region
    $region2: #{tpu_custom_call.1} parent=1 // pred_check
      _
    $region3: #{tpu_custom_call.1} parent=1 // pred_check_branch
      %9 = sbr.rel (0) target = $region5
    $region4: #{tpu_custom_call.1} parent=1 // pred_region
      %s11 = ssub.s32 128, 128
      %12 = vsyncadd [#allocation3], %s11
      %s14 = sshll.u32 [#allocation2], 4
      %s15 = int_to_ptr.vmem [resolvable:$true] %s14
      %17 = dma.hbm_to_vmem [thread:$0]  %s0, 128, %s15, [#allocation3]
    $region5: #{tpu_custom_call.1} parent=1 // pred_fallthru
      _
    // Predicated region
    $region6: #{tpu_custom_call.1} parent=1 // pred_check
      _
    $region7: #{tpu_custom_call.1} parent=1 // pred_check_branch
      %19 = sbr.rel (0) target = $region9
    $region8: #{tpu_custom_call.1} parent=1 // pred_region
      %20 = dma.done [#allocation3], 128
    $region9: #{tpu_custom_call.1} parent=1 // pred_fallthru
      _
    %v21 = vld [vmem:[#allocation2] sm:$0xff]
    %22 = vrot.lane.b32.xlu0 %v21, 1
    %v23 = vpop.permute.xlu0 %22
    %24 = vst [vmem:[#allocation5] sm:$0xff] %v23
    // Predicated region
    $region10: #{tpu_custom_call.1} parent=1 // pred_check
      _
    $region11: #{tpu_custom_call.1} parent=1 // pred_check_branch
      %26 = sbr.rel (0) target = $region13
    $region12: #{tpu_custom_call.1} parent=1 // pred_region
      %s28 = ssub.s32 128, 128
      %29 = vsyncadd [#allocation4], %s28
      %s31 = sshll.u32 [#allocation5], 4
      %s32 = int_to_ptr.vmem [resolvable:$true] %s31
      %34 = dma.vmem_to_hbm [thread:$0]  %s32, 128, %s1, [#allocation4]
    $region13: #{tpu_custom_call.1} parent=1 // pred_fallthru
      _
    // Predicated region
    $region14: #{tpu_custom_call.1} parent=1 // pred_check
      _
    $region15: #{tpu_custom_call.1} parent=1 // pred_check_branch
      %36 = sbr.rel (0) target = $region17
    $region16: #{tpu_custom_call.1} parent=1 // pred_region
      %37 = dma.done [#allocation4], 128
    $region17: #{tpu_custom_call.1} parent=1 // pred_fallthru
      _
    %38 = vsyncpa [#allocation3], 1
    %39 = vsyncpa [#allocation4], 1

</llo_original>
